<compile_context>
chip_gen: v5e
topology: v5e:2x2
jax: 0.10.0
libtpu: 0.0.40
codegen_flags: <defaults>
</compile_context>

<pallas_src>
import functools

import jax
import jax.numpy as jnp
from jax.experimental import pallas as pl
from jax.experimental.pallas import tpu as pltpu  # noqa: F401  (TPU backend)

_LANE = 128     # lane width: last dim of every operand padded to a multiple of this
_SUBLANE = 8    # sublane width: batch padded to a multiple of this


def _round_up(x: int, m: int) -> int:
    return (x + m - 1) // m * m


def _fused_mlp_kernel(*refs, num_layers: int):
    """refs = (x_ref, w1, b1, w2, b2, ..., wn, bn, o_ref); all VMEM-resident.

    Computes h = relu(...relu(relu(x@w1+b1)@w2+b2)...) @ wn + bn entirely
    in-registers/VMEM; only the final result is stored.
    """
    x_ref = refs[0]
    o_ref = refs[-1]
    wb = refs[1:-1]

    h = x_ref[...]
    for i in range(num_layers):
        w = wb[2 * i][...]
        b = wb[2 * i + 1][...]          # (1, Dout_padded), broadcasts over batch
        h = jnp.dot(h, w, preferred_element_type=jnp.float32) + b
        if i != num_layers - 1:         # ReLU on all but the output layer
            h = jnp.maximum(h, 0.0)
    o_ref[...] = h.astype(o_ref.dtype)


def init_simple_net_params(key, net_params, in_size, out_size):
    """Deterministic param init matching SimpleNet's layer shapes.

    Returns list of (W, b) with W shaped [in, out] (transposed vs. PyTorch).
    Layer order: fc_in, fc_layers[0..n-2], fc_out.
    """
    dims = [in_size, net_params[0]]
    for i in range(len(net_params) - 1):
        dims.append(net_params[i + 1])
    dims.append(out_size)
    # dims = [in_size, net_params[0], ..., net_params[-1], out_size]

    params = []
    for fan_in, fan_out in zip(dims[:-1], dims[1:]):
        key, kw, kb = jax.random.split(key, 3)
        bound = 1.0 / jnp.sqrt(fan_in)
        w = jax.random.uniform(kw, (fan_in, fan_out), jnp.float32, -bound, bound)
        b = jax.random.uniform(kb, (fan_out,), jnp.float32, -bound, bound)
        params.append((w, b))
    return params


def simple_net_forward(params, x):
    """ReLU(fc_in) -> ReLU(mid layers) -> fc_out, as one fused Pallas kernel."""
    B, in_size = x.shape
    out_size = params[-1][0].shape[1]
    num_layers = len(params)

    bp = _round_up(B, _SUBLANE)
    in_p = _round_up(in_size, _LANE)
    out_p = _round_up(out_size, _LANE)

    # Zero-pad input to (bp, in_p): padded weight rows are zero, so padding is exact.
    xp = jnp.zeros((bp, in_p), jnp.float32).at[:B, :in_size].set(x)

    # Zero-pad every (W, b) to lane/sublane-aligned shapes.
    padded_wb = []
    for (w, b) in params:
        din, dout = w.shape
        dip, dop = _round_up(din, _LANE), _round_up(dout, _LANE)
        wp = jnp.zeros((dip, dop), jnp.float32).at[:din, :dout].set(w)
        bpad = jnp.zeros((1, dop), jnp.float32).at[0, :dout].set(b)
        padded_wb.extend([wp, bpad])

    # Single program, no grid: every operand is a whole-array VMEM block.
    # TODO(synk): for batch >> 8, add a batch grid axis with
    # dimension_semantics=("parallel",) so v7x's two TensorCores both run.
    yp = pl.pallas_call(
        functools.partial(_fused_mlp_kernel, num_layers=num_layers),
        out_shape=jax.ShapeDtypeStruct((bp, out_p), jnp.float32),
    )(xp, *padded_wb)

    return yp[:B, :out_size]


if __name__ == "__main__":
    # SimpleNet(net_params=[32, 64], in_size=16, out_size=8), batch=8
    net_params = [32, 64]
    in_size, out_size = 16, 8
    batch = 8

    key = jax.random.PRNGKey(0)
    key, kx = jax.random.split(key)
    x = jax.random.normal(kx, (batch, in_size), jnp.float32)

    params = init_simple_net_params(key, net_params, in_size, out_size)

    fwd = jax.jit(simple_net_forward)
    y = fwd(params, x)
    jax.block_until_ready(y)

    # Reference check in plain JAX (same math, unpadded).
    h = x
    for i, (w, b) in enumerate(params):
        h = h @ w + b
        if i != len(params) - 1:
            h = jnp.maximum(h, 0.0)
    assert y.shape == (batch, out_size)
    assert jnp.allclose(y, h, atol=1e-5, rtol=1e-5)

    print("KERNEL_OK")
</pallas_src>

<mosaic_0001>
module attributes {stable_mosaic.version = 11 : i64} {
  func.func @_fused_mlp_kernel(%arg0: memref<8x128xf32, #tpu.memory_space<vmem>>, %arg1: memref<128x128xf32, #tpu.memory_space<vmem>>, %arg2: memref<1x128xf32, #tpu.memory_space<vmem>>, %arg3: memref<128x128xf32, #tpu.memory_space<vmem>>, %arg4: memref<1x128xf32, #tpu.memory_space<vmem>>, %arg5: memref<128x128xf32, #tpu.memory_space<vmem>>, %arg6: memref<1x128xf32, #tpu.memory_space<vmem>>, %arg7: memref<8x128xf32, #tpu.memory_space<vmem>>) attributes {dimension_semantics = [], scalar_prefetch = 0 : i64, scratch_operands = 0 : i64, tpu.core_type = #tpu.core_type<tc>} {
    %c0 = arith.constant 0 : index
    %c0_0 = arith.constant 0 : index
    %0 = vector.load %arg0[%c0, %c0_0] : memref<8x128xf32, #tpu.memory_space<vmem>>, vector<8x128xf32>
    %c0_1 = arith.constant 0 : index
    %c0_2 = arith.constant 0 : index
    %1 = vector.load %arg1[%c0_1, %c0_2] : memref<128x128xf32, #tpu.memory_space<vmem>>, vector<128x128xf32>
    %c0_3 = arith.constant 0 : index
    %c0_4 = arith.constant 0 : index
    %2 = vector.load %arg2[%c0_3, %c0_4] : memref<1x128xf32, #tpu.memory_space<vmem>>, vector<1x128xf32>
    %cst = arith.constant dense<0.000000e+00> : vector<8x128xf32>
    %3 = tpu.matmul %0, %1, %cst {dimension_numbers = #tpu.dot_dimension_numbers<[1], [0], [0], [1], [0, 0, 1, 1], [], []>} : vector<8x128xf32>, vector<128x128xf32>, vector<8x128xf32> -> vector<8x128xf32>
    %4 = vector.broadcast %2 : vector<1x128xf32> to vector<8x128xf32>
    %5 = arith.addf %3, %4 : vector<8x128xf32>
    %cst_5 = arith.constant 0.000000e+00 : f32
    %6 = vector.broadcast %cst_5 : f32 to vector<8x128xf32>
    %7 = arith.maximumf %5, %6 : vector<8x128xf32>
    %c0_6 = arith.constant 0 : index
    %c0_7 = arith.constant 0 : index
    %8 = vector.load %arg3[%c0_6, %c0_7] : memref<128x128xf32, #tpu.memory_space<vmem>>, vector<128x128xf32>
    %c0_8 = arith.constant 0 : index
    %c0_9 = arith.constant 0 : index
    %9 = vector.load %arg4[%c0_8, %c0_9] : memref<1x128xf32, #tpu.memory_space<vmem>>, vector<1x128xf32>
    %cst_10 = arith.constant dense<0.000000e+00> : vector<8x128xf32>
    %10 = tpu.matmul %7, %8, %cst_10 {dimension_numbers = #tpu.dot_dimension_numbers<[1], [0], [0], [1], [0, 0, 1, 1], [], []>} : vector<8x128xf32>, vector<128x128xf32>, vector<8x128xf32> -> vector<8x128xf32>
    %11 = vector.broadcast %9 : vector<1x128xf32> to vector<8x128xf32>
    %12 = arith.addf %10, %11 : vector<8x128xf32>
    %cst_11 = arith.constant 0.000000e+00 : f32
    %13 = vector.broadcast %cst_11 : f32 to vector<8x128xf32>
    %14 = arith.maximumf %12, %13 : vector<8x128xf32>
    %c0_12 = arith.constant 0 : index
    %c0_13 = arith.constant 0 : index
    %15 = vector.load %arg5[%c0_12, %c0_13] : memref<128x128xf32, #tpu.memory_space<vmem>>, vector<128x128xf32>
    %c0_14 = arith.constant 0 : index
    %c0_15 = arith.constant 0 : index
    %16 = vector.load %arg6[%c0_14, %c0_15] : memref<1x128xf32, #tpu.memory_space<vmem>>, vector<1x128xf32>
    %cst_16 = arith.constant dense<0.000000e+00> : vector<8x128xf32>
    %17 = tpu.matmul %14, %15, %cst_16 {dimension_numbers = #tpu.dot_dimension_numbers<[1], [0], [0], [1], [0, 0, 1, 1], [], []>} : vector<8x128xf32>, vector<128x128xf32>, vector<8x128xf32> -> vector<8x128xf32>
    %18 = vector.broadcast %16 : vector<1x128xf32> to vector<8x128xf32>
    %19 = arith.addf %17, %18 : vector<8x128xf32>
    %c0_17 = arith.constant 0 : index
    %c0_18 = arith.constant 0 : index
    %20 = vector.load %arg7[%c0_17, %c0_18] : memref<8x128xf32, #tpu.memory_space<vmem>>, vector<8x128xf32>
    tpu.vector_store %arg7[%c0_17, %c0_18], %19 {strides = array<i32>} : memref<8x128xf32, #tpu.memory_space<vmem>>, vector<8x128xf32>,
    return
  }
}

</mosaic_0001>

<llo_original>
// kernel: simple_net_forward.1
$region0: #{simple_net_forward.1}
  #allocation0 [shape = 'u32[]', space=smem, size = 0x4, offset = 0x4, fixed_abs, tag = 'smem constant byte address 0x4 - core index']
  #allocation1 [shape = 'u32[72,128]{1,0:T(1,128)}', space=vmem, size = 0x9000, scoped, tag = 'internal scratch']
  %s0 = inlined_call_operand.vmem [shape: f32[8,128], index: 0, kind: input, shape index: {}]
  %s1 = inlined_call_operand.vmem [shape: f32[128,128], index: 1, kind: input, shape index: {}]
  %s2 = inlined_call_operand.vmem [shape: f32[1,128], index: 2, kind: input, shape index: {}]
  %s3 = inlined_call_operand.vmem [shape: f32[128,128], index: 3, kind: input, shape index: {}]
  %s4 = inlined_call_operand.vmem [shape: f32[1,128], index: 4, kind: input, shape index: {}]
  %s5 = inlined_call_operand.vmem [shape: f32[128,128], index: 5, kind: input, shape index: {}]
  %s6 = inlined_call_operand.vmem [shape: f32[1,128], index: 6, kind: input, shape index: {}]
  %s7 = inlined_call_operand.hbm [shape: f32[8,128], index: 7, kind: output, shape index: {}]
  %s8 = sld [smem:[#allocation0]]
  $region38: #{simple_net_forward.1} parent=0
    _
  %s10 = ssub.s32 1, %s8
  %s11 = scalar_select 0, %s10, %s8
  $region1: #{simple_net_forward.1} parent=0
    #allocation2 [shape = 'u8[4096]{0}', space=vmem, size = 0x1000, scoped, tag = 'output window, operand 0, single buffered']
    #allocation3 [shape = 's32[1]{0}', space=sflag, size = 0x4, scoped, tag = 'scoped memory for simple_net_forward.1']
    %12 = vsyncpa [#allocation3], 0
    // Predicated region
    $region2: #{simple_net_forward.1} parent=1 // pred_check
      _
    $region3: #{simple_net_forward.1} parent=1 // pred_check_branch
      %14 = sbr.rel (0) target = $region5
    $region4: #{simple_net_forward.1} parent=1 // pred_region
      _
    $region5: #{simple_net_forward.1} parent=1 // pred_fallthru
      _
    // Predicated region
    $region6: #{simple_net_forward.1} parent=1 // pred_check
      _
    $region7: #{simple_net_forward.1} parent=1 // pred_check_branch
      %16 = sbr.rel (0) target = $region9
    $region8: #{simple_net_forward.1} parent=1 // pred_region
      _
    $region9: #{simple_net_forward.1} parent=1 // pred_fallthru
      _
    // Predicated region
    $region10: #{simple_net_forward.1} parent=1 // pred_check
      _
    $region11: #{simple_net_forward.1} parent=1 // pred_check_branch
      %18 = sbr.rel (0) target = $region13
    $region12: #{simple_net_forward.1} parent=1 // pred_region
      _
    $region13: #{simple_net_forward.1} parent=1 // pred_fallthru
      _
    // Predicated region
    $region14: #{simple_net_forward.1} parent=1 // pred_check
      _
    $region15: #{simple_net_forward.1} parent=1 // pred_check_branch
      %20 = sbr.rel (0) target = $region17
    $region16: #{simple_net_forward.1} parent=1 // pred_region
      _
    $region17: #{simple_net_forward.1} parent=1 // pred_fallthru
      _
    // Predicated region
    $region18: #{simple_net_forward.1} parent=1 // pred_check
      _
    $region19: #{simple_net_forward.1} parent=1 // pred_check_branch
      %22 = sbr.rel (0) target = $region21
    $region20: #{simple_net_forward.1} parent=1 // pred_region
      _
    $region21: #{simple_net_forward.1} parent=1 // pred_fallthru
      _
    // Predicated region
    $region22: #{simple_net_forward.1} parent=1 // pred_check
      _
    $region23: #{simple_net_forward.1} parent=1 // pred_check_branch
      %24 = sbr.rel (0) target = $region25
    $region24: #{simple_net_forward.1} parent=1 // pred_region
      _
    $region25: #{simple_net_forward.1} parent=1 // pred_fallthru
      _
    // Predicated region
    $region26: #{simple_net_forward.1} parent=1 // pred_check
      _
    $region27: #{simple_net_forward.1} parent=1 // pred_check_branch
      %26 = sbr.rel (0) target = $region29
    $region28: #{simple_net_forward.1} parent=1 // pred_region
      _
    $region29: #{simple_net_forward.1} parent=1 // pred_fallthru
      _
    %v27 = vld [vmem:[%s0] sm:$0xff]
    %v28 = vld [vmem:[%s1] sm:$0xff]
    %v29 = vld [vmem:[%s1 + $0x8] sm:$0xff]
    %v30 = vld [vmem:[%s1 + $0x10] sm:$0xff]
    %v31 = vld [vmem:[%s1 + $0x18] sm:$0xff]
    %v32 = vld [vmem:[%s1 + $0x20] sm:$0xff]
    %v33 = vld [vmem:[%s1 + $0x28] sm:$0xff]
    %v34 = vld [vmem:[%s1 + $0x30] sm:$0xff]
    %v35 = vld [vmem:[%s1 + $0x38] sm:$0xff]
    %v36 = vld [vmem:[%s1 + $0x40] sm:$0xff]
    %v37 = vld [vmem:[%s1 + $0x48] sm:$0xff]
    %v38 = vld [vmem:[%s1 + $0x50] sm:$0xff]
    %v39 = vld [vmem:[%s1 + $0x58] sm:$0xff]
    %v40 = vld [vmem:[%s1 + $0x60] sm:$0xff]
    %v41 = vld [vmem:[%s1 + $0x68] sm:$0xff]
    %v42 = vld [vmem:[%s1 + $0x70] sm:$0xff]
    %v43 = vld [vmem:[%s1 + $0x78] sm:$0xff]
    %v44 = vld [vmem:[%s2] sm:$0x1]
    %v46 = vperm.slane %v44, 0
    %48 = vmatpush.msra.mxu0 %v43
    %49 = vmatpush.msra.mxu0 %v42
    %50 = vmatpush.msra.mxu0 %v41
    %51 = vmatpush.msra.mxu0 %v40
    %52 = vmatpush.msra.mxu0 %v39
    %53 = vmatpush.msra.mxu0 %v38
    %54 = vmatpush.msra.mxu0 %v37
    %55 = vmatpush.msra.mxu0 %v36
    %56 = vmatpush.msra.mxu0 %v35
    %57 = vmatpush.msra.mxu0 %v34
    %58 = vmatpush.msra.mxu0 %v33
    %59 = vmatpush.msra.mxu0 %v32
    %60 = vmatpush.msra.mxu0 %v31
    %61 = vmatpush.msra.mxu0 %v30
    %62 = vmatpush.msra.mxu0 %v29
    %63 = vmatpush.msra.mxu0 %v28
    %64 = vmatmul.f32.gmra.mxu0 %v27
    %v65 = vpop.f32.mrf.mxu0
    %v66 = vadd.f32 %v46, %v65
    %67 = vdwg.mxu0
    %v68 = vmax.f32 %v66, 0.0
    %v69 = vld [vmem:[%s3] sm:$0xff]
    %v70 = vld [vmem:[%s3 + $0x8] sm:$0xff]
    %v71 = vld [vmem:[%s3 + $0x10] sm:$0xff]
    %v72 = vld [vmem:[%s3 + $0x18] sm:$0xff]
    %v73 = vld [vmem:[%s3 + $0x20] sm:$0xff]
    %v74 = vld [vmem:[%s3 + $0x28] sm:$0xff]
    %v75 = vld [vmem:[%s3 + $0x30] sm:$0xff]
    %v76 = vld [vmem:[%s3 + $0x38] sm:$0xff]
    %v77 = vld [vmem:[%s3 + $0x40] sm:$0xff]
    %v78 = vld [vmem:[%s3 + $0x48] sm:$0xff]
    %v79 = vld [vmem:[%s3 + $0x50] sm:$0xff]
    %v80 = vld [vmem:[%s3 + $0x58] sm:$0xff]
    %v81 = vld [vmem:[%s3 + $0x60] sm:$0xff]
    %v82 = vld [vmem:[%s3 + $0x68] sm:$0xff]
    %v83 = vld [vmem:[%s3 + $0x70] sm:$0xff]
    %v84 = vld [vmem:[%s3 + $0x78] sm:$0xff]
    %v85 = vld [vmem:[%s4] sm:$0x1]
    %v87 = vperm.slane %v85, 0
    %89 = vmatpush.msra.mxu0 %v84
    %90 = vmatpush.msra.mxu0 %v83
    %91 = vmatpush.msra.mxu0 %v82
    %92 = vmatpush.msra.mxu0 %v81
    %93 = vmatpush.msra.mxu0 %v80
    %94 = vmatpush.msra.mxu0 %v79
    %95 = vmatpush.msra.mxu0 %v78
    %96 = vmatpush.msra.mxu0 %v77
    %97 = vmatpush.msra.mxu0 %v76
    %98 = vmatpush.msra.mxu0 %v75
    %99 = vmatpush.msra.mxu0 %v74
    %100 = vmatpush.msra.mxu0 %v73
    %101 = vmatpush.msra.mxu0 %v72
    %102 = vmatpush.msra.mxu0 %v71
    %103 = vmatpush.msra.mxu0 %v70
    %104 = vmatpush.msra.mxu0 %v69
    %105 = vmatmul.f32.gmra.mxu0 %v68
    %v106 = vpop.f32.mrf.mxu0
    %v107 = vadd.f32 %v87, %v106
    %108 = vdwg.mxu0
    %v109 = vmax.f32 %v107, 0.0
    %v110 = vld [vmem:[%s5] sm:$0xff]
    %v111 = vld [vmem:[%s5 + $0x8] sm:$0xff]
    %v112 = vld [vmem:[%s5 + $0x10] sm:$0xff]
    %v113 = vld [vmem:[%s5 + $0x18] sm:$0xff]
    %v114 = vld [vmem:[%s5 + $0x20] sm:$0xff]
    %v115 = vld [vmem:[%s5 + $0x28] sm:$0xff]
    %v116 = vld [vmem:[%s5 + $0x30] sm:$0xff]
    %v117 = vld [vmem:[%s5 + $0x38] sm:$0xff]
    %v118 = vld [vmem:[%s5 + $0x40] sm:$0xff]
    %v119 = vld [vmem:[%s5 + $0x48] sm:$0xff]
    %v120 = vld [vmem:[%s5 + $0x50] sm:$0xff]
    %v121 = vld [vmem:[%s5 + $0x58] sm:$0xff]
    %v122 = vld [vmem:[%s5 + $0x60] sm:$0xff]
    %v123 = vld [vmem:[%s5 + $0x68] sm:$0xff]
    %v124 = vld [vmem:[%s5 + $0x70] sm:$0xff]
    %v125 = vld [vmem:[%s5 + $0x78] sm:$0xff]
    %v126 = vld [vmem:[%s6] sm:$0x1]
    %v128 = vperm.slane %v126, 0
    %130 = vmatpush.msra.mxu0 %v125
    %131 = vmatpush.msra.mxu0 %v124
    %132 = vmatpush.msra.mxu0 %v123
    %133 = vmatpush.msra.mxu0 %v122
    %134 = vmatpush.msra.mxu0 %v121
    %135 = vmatpush.msra.mxu0 %v120
    %136 = vmatpush.msra.mxu0 %v119
    %137 = vmatpush.msra.mxu0 %v118
    %138 = vmatpush.msra.mxu0 %v117
    %139 = vmatpush.msra.mxu0 %v116
    %140 = vmatpush.msra.mxu0 %v115
    %141 = vmatpush.msra.mxu0 %v114
    %142 = vmatpush.msra.mxu0 %v113
    %143 = vmatpush.msra.mxu0 %v112
    %144 = vmatpush.msra.mxu0 %v111
    %145 = vmatpush.msra.mxu0 %v110
    %146 = vmatmul.f32.gmra.mxu0 %v109
    %v147 = vpop.f32.mrf.mxu0
    %v148 = vadd.f32 %v128, %v147
    %149 = vdwg.mxu0
    %150 = vst [vmem:[#allocation2] sm:$0xff] %v148
    // Predicated region
    $region30: #{simple_net_forward.1} parent=1 // pred_check
      _
    $region31: #{simple_net_forward.1} parent=1 // pred_check_branch
      %152 = sbr.rel (0) target = $region33
    $region32: #{simple_net_forward.1} parent=1 // pred_region
      %154 = vsyncadd [#allocation3], 0
      %s156 = sshll.u32 [#allocation2], 4
      %s157 = int_to_ptr.vmem [resolvable:$true] %s156
      %s158 = sshll.u32 %s7, 4
      %s159 = int_to_ptr.hbm [resolvable:$true] %s158
      %161 = dma.vmem_to_hbm [thread:$0]  %s157, 128, %s159, [#allocation3]
    $region33: #{simple_net_forward.1} parent=1 // pred_fallthru
      _
    // Predicated region
    $region34: #{simple_net_forward.1} parent=1 // pred_check
      _
    $region35: #{simple_net_forward.1} parent=1 // pred_check_branch
      %163 = sbr.rel (0) target = $region37
    $region36: #{simple_net_forward.1} parent=1 // pred_region
      %165 = dma.done [#allocation3], 128
    $region37: #{simple_net_forward.1} parent=1 // pred_fallthru
      _
    %166 = vsyncpa [#allocation3], 1

</llo_original>
